<compile_context>
chip_gen: v7x
topology: tpu7x:2x2x1
jax: 0.10.0
libtpu: 0.0.40
codegen_flags: <defaults>
</compile_context>

<pallas_src>
import jax
import jax.numpy as jnp
from jax.experimental import pallas as pl
from jax.experimental.pallas import tpu as pltpu

_LANE = 128          # TPU lane width (last-dim alignment)
_MIN_TILE_ROWS = 16  # sublane-group multiple (covers bf16 packing of intermediates)


def _round_up(n, m):
    return ((n + m - 1) // m) * m


def _mlp_kernel(x_ref, w1_ref, w2_ref, w3_ref, b3_ref, o_ref):
    # x_ref: (TM, in_p) f32; w*: bf16 (pre-padded, VMEM-resident);
    # b3: (1, out_p) f32; o: (TM, out_p) out_dtype (lane-dense store).
    x = x_ref[...].astype(w1_ref.dtype)                       # in-kernel f32 -> bf16 cast (VPU)
    h1 = jnp.dot(x, w1_ref[...], preferred_element_type=jnp.float32)
    h1 = jnp.maximum(h1, 0.0).astype(w2_ref.dtype)             # ReLU, back to bf16 for MXU
    h2 = jnp.dot(h1, w2_ref[...], preferred_element_type=jnp.float32)
    h2 = jnp.maximum(h2, 0.0).astype(w3_ref.dtype)             # ReLU
    logits = jnp.dot(h2, w3_ref[...], preferred_element_type=jnp.float32)
    o_ref[...] = (logits + b3_ref[...]).astype(o_ref.dtype)    # fused bias epilogue


def prepare_mlp_params(w1, w2, w3, b3, *, compute_dtype=jnp.bfloat16):
    """One-time parameter prep: lane-pad every contraction/output dim to a
    multiple of 128 and cast to the MXU input dtype.  Call once at setup so
    every forward streams the weights through HBM exactly once (inside the
    pallas_call), with no per-call pad/convert ops."""
    in_dim, hid = w1.shape
    out_dim = w3.shape[1]
    in_p = _round_up(in_dim, _LANE)
    hid_p = _round_up(hid, _LANE)
    out_p = _round_up(out_dim, _LANE)

    def pad2(a, rows, cols, dtype):
        return jnp.pad(a, ((0, rows - a.shape[0]), (0, cols - a.shape[1]))).astype(dtype)

    return {
        "w1": pad2(w1, in_p, hid_p, compute_dtype),
        "w2": pad2(w2, hid_p, hid_p, compute_dtype),
        "w3": pad2(w3, hid_p, out_p, compute_dtype),   # padded output columns are zero
        "b3": jnp.pad(b3, (0, out_p - out_dim)).reshape(1, out_p).astype(jnp.float32),
        "in_dim": in_dim,
        "out_dim": out_dim,
    }


def mlp_forward(x_nchw, params, *, block_m=512, out_dtype=jnp.float32):
    """x_nchw: (B, C, H, W) float32. Returns (B, out_dim) in out_dtype."""
    w1p, w2p, w3p, b3p = params["w1"], params["w2"], params["w3"], params["b3"]
    in_dim, out_dim = params["in_dim"], params["out_dim"]
    in_p, hid_p = w1p.shape
    out_p = w3p.shape[1]

    B = x_nchw.shape[0]
    x2d = x_nchw.reshape(B, -1)                 # same as torch .view(-1, in_dim)
    assert x2d.shape[1] == in_dim, (x2d.shape, in_dim)

    # --- M tiling ---------------------------------------------------------
    # Big tiles amortize per-grid-step overhead; >=2 programs (when the batch
    # has enough rows) lets the "parallel" M axis shard across both v7x TCs;
    # picking tm ~= ceil(B / n_prog) (rounded to 16) caps zero-row padding
    # waste at one sublane group instead of up to a full tile.
    n_prog = max(-(-B // block_m), 1)
    if B >= 2 * _MIN_TILE_ROWS:
        n_prog = max(n_prog, 2)
    tm = _round_up(-(-B // n_prog), _MIN_TILE_ROWS)
    b_p = _round_up(B, tm)

    # x stays f32 (cast to bf16 in-kernel); only pad when strictly necessary.
    pad_rows, pad_cols = b_p - B, in_p - in_dim
    if pad_rows or pad_cols:
        x2d = jnp.pad(x2d, ((0, pad_rows), (0, pad_cols)))

    grid = (b_p // tm,)

    out_padded = pl.pallas_call(
        _mlp_kernel,
        out_shape=jax.ShapeDtypeStruct((b_p, out_p), out_dtype),
        grid_spec=pltpu.PrefetchScalarGridSpec(
            num_scalar_prefetch=0,
            grid=grid,
            in_specs=[
                pl.BlockSpec((tm, in_p), lambda i: (i, 0)),      # streamed x tiles (f32)
                pl.BlockSpec((in_p, hid_p), lambda i: (0, 0)),   # VMEM-resident weights
                pl.BlockSpec((hid_p, hid_p), lambda i: (0, 0)),
                pl.BlockSpec((hid_p, out_p), lambda i: (0, 0)),
                pl.BlockSpec((1, out_p), lambda i: (0, 0)),      # resident bias
            ],
            out_specs=pl.BlockSpec((tm, out_p), lambda i: (i, 0)),
        ),
        compiler_params=pltpu.CompilerParams(
            dimension_semantics=("parallel",),                   # megacore / 2-TC sharding
        ),
    )(x2d, w1p, w2p, w3p, b3p)

    # NOTE: at these shapes the resident weights are ~100s of KiB, so no
    # vmem_limit_bytes and no pl.Buffered(1) single-buffering is needed.
    # Revisit (single-buffer the constant-index weight specs, size
    # vmem_limit_bytes from the real footprint, or add a K/N grid axis) if
    # hidden_dim grows past ~2k, especially on v7x (64 MiB VMEM / 32 MiB
    # scoped default).
    return out_padded[:B, :out_dim]


def mlp_reference(x_nchw, w1, w2, w3, b3):
    x = x_nchw.reshape(x_nchw.shape[0], -1)
    h = jnp.maximum(x @ w1, 0.0)
    h = jnp.maximum(h @ w2, 0.0)
    return h @ w3 + b3[None, :]


if __name__ == "__main__":
    # Small shapes consistent with the module: in_channel=1, img_sz=16 -> in_dim=256
    B, C, H, W = 8, 1, 16, 16
    in_dim = C * H * W            # 256
    hidden_dim = 128
    out_dim = 10

    key = jax.random.PRNGKey(0)
    kx, k1, k2, k3, kb = jax.random.split(key, 5)

    x = jax.random.normal(kx, (B, C, H, W), dtype=jnp.float32)
    # Deterministic parameter init (uniform, roughly matching nn.Linear scale).
    w1 = jax.random.uniform(k1, (in_dim, hidden_dim), jnp.float32,
                            minval=-1.0, maxval=1.0) / jnp.sqrt(in_dim)
    w2 = jax.random.uniform(k2, (hidden_dim, hidden_dim), jnp.float32,
                            minval=-1.0, maxval=1.0) / jnp.sqrt(hidden_dim)
    w3 = jax.random.uniform(k3, (hidden_dim, out_dim), jnp.float32,
                            minval=-1.0, maxval=1.0) / jnp.sqrt(hidden_dim)
    b3 = jax.random.uniform(kb, (out_dim,), jnp.float32,
                            minval=-1.0, maxval=1.0) / jnp.sqrt(hidden_dim)

    # One-time parameter prep (pad + bf16 cast), then the fused forward.
    params = prepare_mlp_params(w1, w2, w3, b3)
    params = jax.tree_util.tree_map(
        lambda a: jax.block_until_ready(a) if isinstance(a, jax.Array) else a, params)

    out = mlp_forward(x, params)
    jax.block_until_ready(out)

    ref = mlp_reference(x, w1, w2, w3, b3)
    assert out.shape == (B, out_dim)
    # bf16 MXU inputs (f32 accumulation) -> loosened tolerance vs. f32 reference.
    max_err = float(jnp.max(jnp.abs(out - ref)))
    assert max_err < 5e-2, f"max abs error {max_err}"

    print("KERNEL_OK")
</pallas_src>

<mosaic_0001>
module attributes {stable_mosaic.version = 11 : i64} {
  func.func @_mlp_kernel(%arg0: i32, %arg1: memref<16x256xf32, #tpu.memory_space<vmem>>, %arg2: memref<256x128xbf16, #tpu.memory_space<vmem>>, %arg3: memref<128x128xbf16, #tpu.memory_space<vmem>>, %arg4: memref<128x128xbf16, #tpu.memory_space<vmem>>, %arg5: memref<1x128xf32, #tpu.memory_space<vmem>>, %arg6: memref<16x128xf32, #tpu.memory_space<vmem>>) attributes {dimension_semantics = [#tpu.dimension_semantics<parallel>], iteration_bounds = array<i64: 1>, scalar_prefetch = 0 : i64, scratch_operands = 0 : i64, tpu.core_type = #tpu.core_type<tc>, window_params = [{transform_indices = @transform_0, window_bounds = array<i64: 16, 256>}, {pipeline_mode = #tpu.pipeline_mode<synchronous>, transform_indices = @transform_1, window_bounds = array<i64: 256, 128>}, {pipeline_mode = #tpu.pipeline_mode<synchronous>, transform_indices = @transform_2, window_bounds = array<i64: 128, 128>}, {pipeline_mode = #tpu.pipeline_mode<synchronous>, transform_indices = @transform_3, window_bounds = array<i64: 128, 128>}, {pipeline_mode = #tpu.pipeline_mode<synchronous>, transform_indices = @transform_4, window_bounds = array<i64: 1, 128>}, {transform_indices = @transform_5, window_bounds = array<i64: 16, 128>}]} {
    %c0 = arith.constant 0 : index
    %c0_0 = arith.constant 0 : index
    %0 = vector.load %arg1[%c0, %c0_0] : memref<16x256xf32, #tpu.memory_space<vmem>>, vector<16x256xf32>
    %1 = arith.truncf %0 : vector<16x256xf32> to vector<16x256xbf16>
    %c0_1 = arith.constant 0 : index
    %c0_2 = arith.constant 0 : index
    %2 = vector.load %arg2[%c0_1, %c0_2] : memref<256x128xbf16, #tpu.memory_space<vmem>>, vector<256x128xbf16>
    %cst = arith.constant dense<0.000000e+00> : vector<16x128xf32>
    %3 = tpu.matmul %1, %2, %cst {dimension_numbers = #tpu.dot_dimension_numbers<[1], [0], [0], [1], [0, 0, 1, 1], [], []>} : vector<16x256xbf16>, vector<256x128xbf16>, vector<16x128xf32> -> vector<16x128xf32>
    %cst_3 = arith.constant 0.000000e+00 : f32
    %4 = vector.broadcast %cst_3 : f32 to vector<16x128xf32>
    %5 = arith.maximumf %3, %4 : vector<16x128xf32>
    %6 = arith.truncf %5 : vector<16x128xf32> to vector<16x128xbf16>
    %c0_4 = arith.constant 0 : index
    %c0_5 = arith.constant 0 : index
    %7 = vector.load %arg3[%c0_4, %c0_5] : memref<128x128xbf16, #tpu.memory_space<vmem>>, vector<128x128xbf16>
    %cst_6 = arith.constant dense<0.000000e+00> : vector<16x128xf32>
    %8 = tpu.matmul %6, %7, %cst_6 {dimension_numbers = #tpu.dot_dimension_numbers<[1], [0], [0], [1], [0, 0, 1, 1], [], []>} : vector<16x128xbf16>, vector<128x128xbf16>, vector<16x128xf32> -> vector<16x128xf32>
    %cst_7 = arith.constant 0.000000e+00 : f32
    %9 = vector.broadcast %cst_7 : f32 to vector<16x128xf32>
    %10 = arith.maximumf %8, %9 : vector<16x128xf32>
    %11 = arith.truncf %10 : vector<16x128xf32> to vector<16x128xbf16>
    %c0_8 = arith.constant 0 : index
    %c0_9 = arith.constant 0 : index
    %12 = vector.load %arg4[%c0_8, %c0_9] : memref<128x128xbf16, #tpu.memory_space<vmem>>, vector<128x128xbf16>
    %cst_10 = arith.constant dense<0.000000e+00> : vector<16x128xf32>
    %13 = tpu.matmul %11, %12, %cst_10 {dimension_numbers = #tpu.dot_dimension_numbers<[1], [0], [0], [1], [0, 0, 1, 1], [], []>} : vector<16x128xbf16>, vector<128x128xbf16>, vector<16x128xf32> -> vector<16x128xf32>
    %c0_11 = arith.constant 0 : index
    %c0_12 = arith.constant 0 : index
    %14 = vector.load %arg5[%c0_11, %c0_12] : memref<1x128xf32, #tpu.memory_space<vmem>>, vector<1x128xf32>
    %15 = vector.broadcast %14 : vector<1x128xf32> to vector<16x128xf32>
    %16 = arith.addf %13, %15 : vector<16x128xf32>
    %c0_13 = arith.constant 0 : index
    %c0_14 = arith.constant 0 : index
    %17 = vector.load %arg6[%c0_13, %c0_14] : memref<16x128xf32, #tpu.memory_space<vmem>>, vector<16x128xf32>
    tpu.vector_store %arg6[%c0_13, %c0_14], %16 {strides = array<i32>} : memref<16x128xf32, #tpu.memory_space<vmem>>, vector<16x128xf32>,
    return
  }
  func.func @transform_0(%arg0: i32) -> (i32, i32) {
    %c0_i32 = arith.constant 0 : i32
    %c0_i32_0 = arith.constant 0 : i32
    return %arg0, %c0_i32 : i32, i32
  }
  func.func @transform_1(%arg0: i32) -> (i32, i32) {
    %c0_i32 = arith.constant 0 : i32
    %c0_i32_0 = arith.constant 0 : i32
    %c0_i32_1 = arith.constant 0 : i32
    return %c0_i32, %c0_i32_0 : i32, i32
  }
  func.func @transform_2(%arg0: i32) -> (i32, i32) {
    %c0_i32 = arith.constant 0 : i32
    %c0_i32_0 = arith.constant 0 : i32
    %c0_i32_1 = arith.constant 0 : i32
    return %c0_i32, %c0_i32_0 : i32, i32
  }
  func.func @transform_3(%arg0: i32) -> (i32, i32) {
    %c0_i32 = arith.constant 0 : i32
    %c0_i32_0 = arith.constant 0 : i32
    %c0_i32_1 = arith.constant 0 : i32
    return %c0_i32, %c0_i32_0 : i32, i32
  }
  func.func @transform_4(%arg0: i32) -> (i32, i32) {
    %c0_i32 = arith.constant 0 : i32
    %c0_i32_0 = arith.constant 0 : i32
    %c0_i32_1 = arith.constant 0 : i32
    return %c0_i32, %c0_i32_0 : i32, i32
  }
  func.func @transform_5(%arg0: i32) -> (i32, i32) {
    %c0_i32 = arith.constant 0 : i32
    %c0_i32_0 = arith.constant 0 : i32
    return %arg0, %c0_i32 : i32, i32
  }
}

</mosaic_0001>

<llo_original>
// kernel: tpu_custom_call.1
$region0: #{tpu_custom_call.1}
  #allocation0 [shape = 'u32[]', space=smem, size = 0x4, offset = 0x4, fixed_abs, tag = 'smem constant byte address 0x4 - core index']
  #allocation1 [shape = 'u32[144,128]{1,0:T(1,128)}', space=vmem, size = 0x12000, scoped, tag = 'internal scratch']
  %s0 = inlined_call_operand.hbm [shape: f32[16,256], index: 0, kind: input, shape index: {}]
  %s1 = inlined_call_operand.hbm [shape: bf16[256,128], index: 1, kind: input, shape index: {}]
  %s2 = inlined_call_operand.hbm [shape: bf16[128,128], index: 2, kind: input, shape index: {}]
  %s3 = inlined_call_operand.hbm [shape: bf16[128,128], index: 3, kind: input, shape index: {}]
  %s4 = inlined_call_operand.vmem [shape: f32[1,128], index: 4, kind: input, shape index: {}]
  %s5 = inlined_call_operand.hbm [shape: f32[16,128], index: 5, kind: output, shape index: {}]
  %s6 = sld [smem:[#allocation0]]
  $region46: #{tpu_custom_call.1} parent=0
    _
  %s8 = ssub.s32 1, %s6
  %s9 = scalar_select 0, %s8, %s6
  $region1: #{tpu_custom_call.1} parent=0
    #allocation2 [shape = 'u8[16384]{0}', space=vmem, size = 0x4000, scoped, tag = 'input window, operand 0, single buffered']
    #allocation3 [shape = 's32[1]{0}', space=sflag, size = 0x4, scoped, tag = 'scoped memory for tpu_custom_call.1']
    #allocation4 [shape = 's32[1]{0}', space=sflag, size = 0x4, scoped, tag = 'scoped memory for tpu_custom_call.1']
    #allocation5 [shape = 'u8[65536]{0}', space=vmem, size = 0x10000, scoped, tag = 'input window, operand 1, single buffered']
    #allocation6 [shape = 's32[1]{0}', space=sflag, size = 0x4, scoped, tag = 'scoped memory for tpu_custom_call.1']
    #allocation7 [shape = 'u8[32768]{0}', space=vmem, size = 0x8000, scoped, tag = 'input window, operand 2, single buffered']
    #allocation8 [shape = 'u8[32768]{0}', space=vmem, size = 0x8000, scoped, tag = 'input window, operand 3, single buffered']
    #allocation9 [shape = 's32[1]{0}', space=sflag, size = 0x4, scoped, tag = 'scoped memory for tpu_custom_call.1']
    #allocation10 [shape = 'u8[8192]{0}', space=vmem, size = 0x2000, scoped, tag = 'output window, operand 0, single buffered']
    %10 = vsyncpa [#allocation3], 0
    %11 = vsyncpa [#allocation6], 0
    %12 = vsyncpa [#allocation9], 0
    %13 = vsyncpa [#allocation4], 0
    // Predicated region
    $region2: #{tpu_custom_call.1} parent=1 // pred_check
      _
    $region3: #{tpu_custom_call.1} parent=1 // pred_check_branch
      %15 = sbr.rel (0) target = $region5
    $region4: #{tpu_custom_call.1} parent=1 // pred_region
      %s17 = ssub.s32 512, 512
      %18 = vsyncadd [#allocation3], %s17
      %s19 = sshll.u32 [#allocation2], 4
      %s20 = int_to_ptr.vmem [resolvable:$true] %s19
      %25 = dma.hbm_to_vmem [thread:$0]  %s0, 512, %s20, [#allocation3], 256, 256, 16
    $region5: #{tpu_custom_call.1} parent=1 // pred_fallthru
      _
    // Predicated region
    $region6: #{tpu_custom_call.1} parent=1 // pred_check
      _
    $region7: #{tpu_custom_call.1} parent=1 // pred_check_branch
      %27 = sbr.rel (0) target = $region9
    $region8: #{tpu_custom_call.1} parent=1 // pred_region
      %s29 = ssub.s32 2048, 2048
      %30 = vsyncadd [#allocation6], %s29
      %s31 = sshll.u32 [#allocation5], 4
      %s32 = int_to_ptr.vmem [resolvable:$true] %s31
      %37 = dma.hbm_to_vmem [thread:$0]  %s1, 2048, %s32, [#allocation6], 64, 64, 4
    $region9: #{tpu_custom_call.1} parent=1 // pred_fallthru
      _
    // Predicated region
    $region10: #{tpu_custom_call.1} parent=1 // pred_check
      _
    $region11: #{tpu_custom_call.1} parent=1 // pred_check_branch
      %39 = sbr.rel (0) target = $region13
    $region12: #{tpu_custom_call.1} parent=1 // pred_region
      %s41 = ssub.s32 1024, 1024
      %42 = vsyncadd [#allocation6], %s41
      %s43 = sshll.u32 [#allocation7], 4
      %s44 = int_to_ptr.vmem [resolvable:$true] %s43
      %49 = dma.hbm_to_vmem [thread:$0]  %s2, 1024, %s44, [#allocation6], 64, 64, 4
    $region13: #{tpu_custom_call.1} parent=1 // pred_fallthru
      _
    // Predicated region
    $region14: #{tpu_custom_call.1} parent=1 // pred_check
      _
    $region15: #{tpu_custom_call.1} parent=1 // pred_check_branch
      %51 = sbr.rel (0) target = $region17
    $region16: #{tpu_custom_call.1} parent=1 // pred_region
      %s53 = ssub.s32 1024, 1024
      %54 = vsyncadd [#allocation9], %s53
      %s55 = sshll.u32 [#allocation8], 4
      %s56 = int_to_ptr.vmem [resolvable:$true] %s55
      %61 = dma.hbm_to_vmem [thread:$0]  %s3, 1024, %s56, [#allocation9], 64, 64, 4
    $region17: #{tpu_custom_call.1} parent=1 // pred_fallthru
      _
    // Predicated region
    $region18: #{tpu_custom_call.1} parent=1 // pred_check
      _
    $region19: #{tpu_custom_call.1} parent=1 // pred_check_branch
      %63 = sbr.rel (0) target = $region21
    $region20: #{tpu_custom_call.1} parent=1 // pred_region
      _
    $region21: #{tpu_custom_call.1} parent=1 // pred_fallthru
      _
    // Predicated region
    $region22: #{tpu_custom_call.1} parent=1 // pred_check
      _
    $region23: #{tpu_custom_call.1} parent=1 // pred_check_branch
      %65 = sbr.rel (0) target = $region25
    $region24: #{tpu_custom_call.1} parent=1 // pred_region
      %66 = dma.done [#allocation3], 512
    $region25: #{tpu_custom_call.1} parent=1 // pred_fallthru
      _
    // Predicated region
    $region26: #{tpu_custom_call.1} parent=1 // pred_check
      _
    $region27: #{tpu_custom_call.1} parent=1 // pred_check_branch
      %68 = sbr.rel (0) target = $region29
    $region28: #{tpu_custom_call.1} parent=1 // pred_region
      %69 = dma.done [#allocation6], 2048
    $region29: #{tpu_custom_call.1} parent=1 // pred_fallthru
      _
    // Predicated region
    $region30: #{tpu_custom_call.1} parent=1 // pred_check
      _
    $region31: #{tpu_custom_call.1} parent=1 // pred_check_branch
      %71 = sbr.rel (0) target = $region33
    $region32: #{tpu_custom_call.1} parent=1 // pred_region
      %72 = dma.done [#allocation6], 1024
    $region33: #{tpu_custom_call.1} parent=1 // pred_fallthru
      _
    // Predicated region
    $region34: #{tpu_custom_call.1} parent=1 // pred_check
      _
    $region35: #{tpu_custom_call.1} parent=1 // pred_check_branch
      %74 = sbr.rel (0) target = $region37
    $region36: #{tpu_custom_call.1} parent=1 // pred_region
      %75 = dma.done [#allocation9], 1024
    $region37: #{tpu_custom_call.1} parent=1 // pred_fallthru
      _
    %v77 = vld [vmem:[#allocation2] sm:$0xff]
    %v78 = vld [vmem:[#allocation2 + $0x8] sm:$0xff]
    %v79 = vld [vmem:[#allocation2 + $0x10] sm:$0xff]
    %v80 = vld [vmem:[#allocation2 + $0x18] sm:$0xff]
    %v81 = vpack.c.bf16 %v79, %v77
    %v82 = vpack.c.bf16 %v80, %v78
    %v83 = vld [vmem:[#allocation5] sm:$0xf]
    %v84 = vld [vmem:[#allocation5 + $0x4] sm:$0xf]
    %v85 = vld [vmem:[#allocation5 + $0x8] sm:$0xf]
    %v86 = vld [vmem:[#allocation5 + $0xc] sm:$0xf]
    %v87 = vld [vmem:[#allocation5 + $0x10] sm:$0xf]
    %v88 = vld [vmem:[#allocation5 + $0x14] sm:$0xf]
    %v89 = vld [vmem:[#allocation5 + $0x18] sm:$0xf]
    %v90 = vld [vmem:[#allocation5 + $0x1c] sm:$0xf]
    %v91 = vld [vmem:[#allocation5 + $0x20] sm:$0xf]
    %v92 = vld [vmem:[#allocation5 + $0x24] sm:$0xf]
    %v93 = vld [vmem:[#allocation5 + $0x28] sm:$0xf]
    %v94 = vld [vmem:[#allocation5 + $0x2c] sm:$0xf]
    %v95 = vld [vmem:[#allocation5 + $0x30] sm:$0xf]
    %v96 = vld [vmem:[#allocation5 + $0x34] sm:$0xf]
    %v97 = vld [vmem:[#allocation5 + $0x38] sm:$0xf]
    %v98 = vld [vmem:[#allocation5 + $0x3c] sm:$0xf]
    %v99 = vld [vmem:[#allocation5 + $0x40] sm:$0xf]
    %v100 = vld [vmem:[#allocation5 + $0x44] sm:$0xf]
    %v101 = vld [vmem:[#allocation5 + $0x48] sm:$0xf]
    %v102 = vld [vmem:[#allocation5 + $0x4c] sm:$0xf]
    %v103 = vld [vmem:[#allocation5 + $0x50] sm:$0xf]
    %v104 = vld [vmem:[#allocation5 + $0x54] sm:$0xf]
    %v105 = vld [vmem:[#allocation5 + $0x58] sm:$0xf]
    %v106 = vld [vmem:[#allocation5 + $0x5c] sm:$0xf]
    %v107 = vld [vmem:[#allocation5 + $0x60] sm:$0xf]
    %v108 = vld [vmem:[#allocation5 + $0x64] sm:$0xf]
    %v109 = vld [vmem:[#allocation5 + $0x68] sm:$0xf]
    %v110 = vld [vmem:[#allocation5 + $0x6c] sm:$0xf]
    %v111 = vld [vmem:[#allocation5 + $0x70] sm:$0xf]
    %v112 = vld [vmem:[#allocation5 + $0x74] sm:$0xf]
    %v113 = vld [vmem:[#allocation5 + $0x78] sm:$0xf]
    %v114 = vld [vmem:[#allocation5 + $0x7c] sm:$0xf]
    %v147 = vunpack.c.l.b16 %v83
    %v148 = vunpack.c.l.b16 %v84
    %v149 = vunpack.c.l.b16 %v85
    %v150 = vunpack.c.l.b16 %v86
    %v151 = vunpack.c.l.b16 %v87
    %v152 = vunpack.c.l.b16 %v88
    %v153 = vunpack.c.l.b16 %v89
    %v154 = vunpack.c.l.b16 %v90
    %v155 = vunpack.c.l.b16 %v91
    %v156 = vunpack.c.l.b16 %v92
    %v157 = vunpack.c.l.b16 %v93
    %v158 = vunpack.c.l.b16 %v94
    %v159 = vunpack.c.l.b16 %v95
    %v160 = vunpack.c.l.b16 %v96
    %v161 = vunpack.c.l.b16 %v97
    %v162 = vunpack.c.l.b16 %v98
    %v163 = vunpack.c.l.b16 %v99
    %v164 = vunpack.c.l.b16 %v100
    %v165 = vunpack.c.l.b16 %v101
    %v166 = vunpack.c.l.b16 %v102
    %v167 = vunpack.c.l.b16 %v103
    %v168 = vunpack.c.l.b16 %v104
    %v169 = vunpack.c.l.b16 %v105
    %v170 = vunpack.c.l.b16 %v106
    %v171 = vunpack.c.l.b16 %v107
    %v172 = vunpack.c.l.b16 %v108
    %v173 = vunpack.c.l.b16 %v109
    %v174 = vunpack.c.l.b16 %v110
    %v175 = vunpack.c.l.b16 %v111
    %v176 = vunpack.c.l.b16 %v112
    %v177 = vunpack.c.l.b16 %v113
    %v178 = vunpack.c.l.b16 %v114
    %v179 = vpack.c.b16 %v148, %v147
    %v180 = vpack.c.b16 %v150, %v149
    %v181 = vpack.c.b16 %v152, %v151
    %v182 = vpack.c.b16 %v154, %v153
    %v183 = vpack.c.b16 %v156, %v155
    %v184 = vpack.c.b16 %v158, %v157
    %v185 = vpack.c.b16 %v160, %v159
    %v186 = vpack.c.b16 %v162, %v161
    %v187 = vpack.c.b16 %v164, %v163
    %v188 = vpack.c.b16 %v166, %v165
    %v189 = vpack.c.b16 %v168, %v167
    %v190 = vpack.c.b16 %v170, %v169
    %v191 = vpack.c.b16 %v172, %v171
    %v192 = vpack.c.b16 %v174, %v173
    %v193 = vpack.c.b16 %v176, %v175
    %v194 = vpack.c.b16 %v178, %v177
    %211 = vmatprep.subr.bf16.mxu0 0
    %212 = vmatpush1.bf16.msra.mxu0 %v179
    %213 = vmatprep.subr.bf16.mxu0 0
    %214 = vmatpush1.bf16.msra.mxu0 %v180
    %215 = vmatprep.subr.bf16.mxu0 0
    %216 = vmatpush1.bf16.msra.mxu0 %v181
    %217 = vmatprep.subr.bf16.mxu0 0
    %218 = vmatpush1.bf16.msra.mxu0 %v182
    %219 = vmatprep.subr.bf16.mxu0 0
    %220 = vmatpush1.bf16.msra.mxu0 %v183
    %221 = vmatprep.subr.bf16.mxu0 0
    %222 = vmatpush1.bf16.msra.mxu0 %v184
    %223 = vmatprep.subr.bf16.mxu0 0
    %224 = vmatpush1.bf16.msra.mxu0 %v185
    %225 = vmatprep.subr.bf16.mxu0 0
    %226 = vmatpush1.bf16.msra.mxu0 %v186
    %227 = vmatprep.subr.bf16.mxu0 0
    %228 = vmatpush1.bf16.msra.mxu0 %v187
    %229 = vmatprep.subr.bf16.mxu0 0
    %230 = vmatpush1.bf16.msra.mxu0 %v188
    %231 = vmatprep.subr.bf16.mxu0 0
    %232 = vmatpush1.bf16.msra.mxu0 %v189
    %233 = vmatprep.subr.bf16.mxu0 0
    %234 = vmatpush1.bf16.msra.mxu0 %v190
    %235 = vmatprep.subr.bf16.mxu0 0
    %236 = vmatpush1.bf16.msra.mxu0 %v191
    %237 = vmatprep.subr.bf16.mxu0 0
    %238 = vmatpush1.bf16.msra.mxu0 %v192
    %239 = vmatprep.subr.bf16.mxu0 0
    %240 = vmatpush1.bf16.msra.mxu0 %v193
    %241 = vmatprep.subr.bf16.mxu0 0
    %242 = vmatpush1.bf16.msra.mxu0 %v194
    %243 = vmatprep.mubr.bf16.mxu0 %v82
    %244 = vmatmul.mubr.bf16.gmra.mrb[0].mxu0 %v81
    %v245 = vpop.f32.mrb[0].mxu0
    %v246 = vadd.f32 0.0, %v245
    %v247 = vpop.f32.mrb[0].mxu0
    %v248 = vpop.f32.mrb[0].mxu0
    %v249 = vadd.f32 0.0, %v248
    %v250 = vpop.f32.mrb[0].mxu0
    %251 = vdwg.mxu0
    %v252 = vmax.f32 %v246, 0.0
    %v253 = vmax.f32 %v249, 0.0
    %v254 = vpack.c.bf16 %v253, %v252
    %v255 = vld [vmem:[#allocation7] sm:$0xf]
    %v256 = vld [vmem:[#allocation7 + $0x4] sm:$0xf]
    %v257 = vld [vmem:[#allocation7 + $0x8] sm:$0xf]
    %v258 = vld [vmem:[#allocation7 + $0xc] sm:$0xf]
    %v259 = vld [vmem:[#allocation7 + $0x10] sm:$0xf]
    %v260 = vld [vmem:[#allocation7 + $0x14] sm:$0xf]
    %v261 = vld [vmem:[#allocation7 + $0x18] sm:$0xf]
    %v262 = vld [vmem:[#allocation7 + $0x1c] sm:$0xf]
    %v263 = vld [vmem:[#allocation7 + $0x20] sm:$0xf]
    %v264 = vld [vmem:[#allocation7 + $0x24] sm:$0xf]
    %v265 = vld [vmem:[#allocation7 + $0x28] sm:$0xf]
    %v266 = vld [vmem:[#allocation7 + $0x2c] sm:$0xf]
    %v267 = vld [vmem:[#allocation7 + $0x30] sm:$0xf]
    %v268 = vld [vmem:[#allocation7 + $0x34] sm:$0xf]
    %v269 = vld [vmem:[#allocation7 + $0x38] sm:$0xf]
    %v270 = vld [vmem:[#allocation7 + $0x3c] sm:$0xf]
    %v287 = vunpack.c.l.b16 %v255
    %v288 = vunpack.c.l.b16 %v256
    %v289 = vunpack.c.l.b16 %v257
    %v290 = vunpack.c.l.b16 %v258
    %v291 = vunpack.c.l.b16 %v259
    %v292 = vunpack.c.l.b16 %v260
    %v293 = vunpack.c.l.b16 %v261
    %v294 = vunpack.c.l.b16 %v262
    %v295 = vunpack.c.l.b16 %v263
    %v296 = vunpack.c.l.b16 %v264
    %v297 = vunpack.c.l.b16 %v265
    %v298 = vunpack.c.l.b16 %v266
    %v299 = vunpack.c.l.b16 %v267
    %v300 = vunpack.c.l.b16 %v268
    %v301 = vunpack.c.l.b16 %v269
    %v302 = vunpack.c.l.b16 %v270
    %v303 = vpack.c.b16 %v288, %v287
    %v304 = vpack.c.b16 %v290, %v289
    %v305 = vpack.c.b16 %v292, %v291
    %v306 = vpack.c.b16 %v294, %v293
    %v307 = vpack.c.b16 %v296, %v295
    %v308 = vpack.c.b16 %v298, %v297
    %v309 = vpack.c.b16 %v300, %v299
    %v310 = vpack.c.b16 %v302, %v301
    %319 = vmatprep.subr.bf16.mxu0 0
    %320 = vmatpush1.bf16.msra.mxu0 %v303
    %321 = vmatprep.subr.bf16.mxu0 0
    %322 = vmatpush1.bf16.msra.mxu0 %v304
    %323 = vmatprep.subr.bf16.mxu0 0
    %324 = vmatpush1.bf16.msra.mxu0 %v305
    %325 = vmatprep.subr.bf16.mxu0 0
    %326 = vmatpush1.bf16.msra.mxu0 %v306
    %327 = vmatprep.subr.bf16.mxu0 0
    %328 = vmatpush1.bf16.msra.mxu0 %v307
    %329 = vmatprep.subr.bf16.mxu0 0
    %330 = vmatpush1.bf16.msra.mxu0 %v308
    %331 = vmatprep.subr.bf16.mxu0 0
    %332 = vmatpush1.bf16.msra.mxu0 %v309
    %333 = vmatprep.subr.bf16.mxu0 0
    %334 = vmatpush1.bf16.msra.mxu0 %v310
    %335 = vmatprep.subr.bf16.mxu0 0
    %336 = vmatpush1.bf16.msra.mxu0 0
    %337 = vmatprep.subr.bf16.mxu0 0
    %338 = vmatpush1.bf16.msra.mxu0 0
    %339 = vmatprep.subr.bf16.mxu0 0
    %340 = vmatpush1.bf16.msra.mxu0 0
    %341 = vmatprep.subr.bf16.mxu0 0
    %342 = vmatpush1.bf16.msra.mxu0 0
    %343 = vmatprep.subr.bf16.mxu0 0
    %344 = vmatpush1.bf16.msra.mxu0 0
    %345 = vmatprep.subr.bf16.mxu0 0
    %346 = vmatpush1.bf16.msra.mxu0 0
    %347 = vmatprep.subr.bf16.mxu0 0
    %348 = vmatpush1.bf16.msra.mxu0 0
    %349 = vmatprep.subr.bf16.mxu0 0
    %350 = vmatpush1.bf16.msra.mxu0 0
    %351 = vmatprep.mubr.bf16.mxu0 0
    %352 = vmatmul.mubr.bf16.gmra.mrb[0].mxu0 %v254
    %v353 = vpop.f32.mrb[0].mxu0
    %v354 = vadd.f32 0.0, %v353
    %v355 = vpop.f32.mrb[0].mxu0
    %v356 = vpop.f32.mrb[0].mxu0
    %v357 = vadd.f32 0.0, %v356
    %v358 = vpop.f32.mrb[0].mxu0
    %359 = vdwg.mxu0
    %v360 = vmax.f32 %v354, 0.0
    %v361 = vmax.f32 %v357, 0.0
    %v362 = vpack.c.bf16 %v361, %v360
    %v363 = vld [vmem:[#allocation8] sm:$0xf]
    %v364 = vld [vmem:[#allocation8 + $0x4] sm:$0xf]
    %v365 = vld [vmem:[#allocation8 + $0x8] sm:$0xf]
    %v366 = vld [vmem:[#allocation8 + $0xc] sm:$0xf]
    %v367 = vld [vmem:[#allocation8 + $0x10] sm:$0xf]
    %v368 = vld [vmem:[#allocation8 + $0x14] sm:$0xf]
    %v369 = vld [vmem:[#allocation8 + $0x18] sm:$0xf]
    %v370 = vld [vmem:[#allocation8 + $0x1c] sm:$0xf]
    %v371 = vld [vmem:[#allocation8 + $0x20] sm:$0xf]
    %v372 = vld [vmem:[#allocation8 + $0x24] sm:$0xf]
    %v373 = vld [vmem:[#allocation8 + $0x28] sm:$0xf]
    %v374 = vld [vmem:[#allocation8 + $0x2c] sm:$0xf]
    %v375 = vld [vmem:[#allocation8 + $0x30] sm:$0xf]
    %v376 = vld [vmem:[#allocation8 + $0x34] sm:$0xf]
    %v377 = vld [vmem:[#allocation8 + $0x38] sm:$0xf]
    %v378 = vld [vmem:[#allocation8 + $0x3c] sm:$0xf]
    %v379 = vld [vmem:[%s4] sm:$0x1]
    %v381 = vlaneseq
    %v382 = vshrl.u32 %v381, 7
    %v383 = vsub.s32 0, %v382
    %v384 = vrot.slane %v379, %v383
    %v402 = vunpack.c.l.b16 %v363
    %v403 = vunpack.c.l.b16 %v364
    %v404 = vunpack.c.l.b16 %v365
    %v405 = vunpack.c.l.b16 %v366
    %v406 = vunpack.c.l.b16 %v367
    %v407 = vunpack.c.l.b16 %v368
    %v408 = vunpack.c.l.b16 %v369
    %v409 = vunpack.c.l.b16 %v370
    %v410 = vunpack.c.l.b16 %v371
    %v411 = vunpack.c.l.b16 %v372
    %v412 = vunpack.c.l.b16 %v373
    %v413 = vunpack.c.l.b16 %v374
    %v414 = vunpack.c.l.b16 %v375
    %v415 = vunpack.c.l.b16 %v376
    %v416 = vunpack.c.l.b16 %v377
    %v417 = vunpack.c.l.b16 %v378
    %v418 = vpack.c.b16 %v403, %v402
    %v419 = vpack.c.b16 %v405, %v404
    %v420 = vpack.c.b16 %v407, %v406
    %v421 = vpack.c.b16 %v409, %v408
    %v422 = vpack.c.b16 %v411, %v410
    %v423 = vpack.c.b16 %v413, %v412
    %v424 = vpack.c.b16 %v415, %v414
    %v425 = vpack.c.b16 %v417, %v416
    %434 = vmatprep.subr.bf16.mxu0 0
    %435 = vmatpush1.bf16.msra.mxu0 %v418
    %436 = vmatprep.subr.bf16.mxu0 0
    %437 = vmatpush1.bf16.msra.mxu0 %v419
    %438 = vmatprep.subr.bf16.mxu0 0
    %439 = vmatpush1.bf16.msra.mxu0 %v420
    %440 = vmatprep.subr.bf16.mxu0 0
    %441 = vmatpush1.bf16.msra.mxu0 %v421
    %442 = vmatprep.subr.bf16.mxu0 0
    %443 = vmatpush1.bf16.msra.mxu0 %v422
    %444 = vmatprep.subr.bf16.mxu0 0
    %445 = vmatpush1.bf16.msra.mxu0 %v423
    %446 = vmatprep.subr.bf16.mxu0 0
    %447 = vmatpush1.bf16.msra.mxu0 %v424
    %448 = vmatprep.subr.bf16.mxu0 0
    %449 = vmatpush1.bf16.msra.mxu0 %v425
    %450 = vmatprep.subr.bf16.mxu0 0
    %451 = vmatpush1.bf16.msra.mxu0 0
    %452 = vmatprep.subr.bf16.mxu0 0
    %453 = vmatpush1.bf16.msra.mxu0 0
    %454 = vmatprep.subr.bf16.mxu0 0
    %455 = vmatpush1.bf16.msra.mxu0 0
    %456 = vmatprep.subr.bf16.mxu0 0
    %457 = vmatpush1.bf16.msra.mxu0 0
    %458 = vmatprep.subr.bf16.mxu0 0
    %459 = vmatpush1.bf16.msra.mxu0 0
    %460 = vmatprep.subr.bf16.mxu0 0
    %461 = vmatpush1.bf16.msra.mxu0 0
    %462 = vmatprep.subr.bf16.mxu0 0
    %463 = vmatpush1.bf16.msra.mxu0 0
    %464 = vmatprep.subr.bf16.mxu0 0
    %465 = vmatpush1.bf16.msra.mxu0 0
    %466 = vmatprep.mubr.bf16.mxu0 0
    %467 = vmatmul.mubr.bf16.gmra.mrb[0].mxu0 %v362
    %v468 = vpop.f32.mrb[0].mxu0
    %v469 = vadd.f32 %v384, %v468
    %v470 = vpop.f32.mrb[0].mxu0
    %v471 = vpop.f32.mrb[0].mxu0
    %v472 = vadd.f32 %v384, %v471
    %v473 = vpop.f32.mrb[0].mxu0
    %474 = vdwg.mxu0
    %475 = vst [vmem:[#allocation10] sm:$0xff] %v469
    %476 = vst [vmem:[#allocation10 + $0x8] sm:$0xff] %v472
    // Predicated region
    $region38: #{tpu_custom_call.1} parent=1 // pred_check
      _
    $region39: #{tpu_custom_call.1} parent=1 // pred_check_branch
      %478 = sbr.rel (0) target = $region41
    $region40: #{tpu_custom_call.1} parent=1 // pred_region
      %s480 = ssub.s32 256, 256
      %481 = vsyncadd [#allocation4], %s480
      %s482 = sshll.u32 [#allocation10], 4
      %s483 = int_to_ptr.vmem [resolvable:$true] %s482
      %488 = dma.vmem_to_hbm [thread:$0]  %s483, 256, %s5, [#allocation4], 128, 128, 8
    $region41: #{tpu_custom_call.1} parent=1 // pred_fallthru
      _
    // Predicated region
    $region42: #{tpu_custom_call.1} parent=1 // pred_check
      _
    $region43: #{tpu_custom_call.1} parent=1 // pred_check_branch
      %490 = sbr.rel (0) target = $region45
    $region44: #{tpu_custom_call.1} parent=1 // pred_region
      %491 = dma.done [#allocation4], 256
    $region45: #{tpu_custom_call.1} parent=1 // pred_fallthru
      _
    %492 = vsyncpa [#allocation3], 1
    %493 = vsyncpa [#allocation6], 1
    %494 = vsyncpa [#allocation9], 1
    %495 = vsyncpa [#allocation4], 1

</llo_original>
